<compile_context>
chip_gen: v6e
topology: v6e:2x2x1
jax: 0.10.0
libtpu: 0.0.40
codegen_flags: <defaults>
</compile_context>

<pallas_src>
from functools import partial

import jax
import jax.numpy as jnp
from jax.experimental import pallas as pl
from jax.experimental.pallas import tpu as pltpu

MAX_ANGLE = 0.26179938779914946  # external constant from controllers.py (15 deg)

_LANE = 128          # TPU vreg lane width
_DEFAULT_TM = 2048   # lanes (batch elements) per grid step


def _round_up(n: int, m: int) -> int:
    return ((n + m - 1) // m) * m


def _cdiv(a: int, b: int) -> int:
    return -(-a // b)


def _pid_kernel(w_ref, x_ref, out_ref, *, n_in: int, n_out: int, max_angle: float):
    """One lane-tile of the batch.

    w_ref:   [n_out, n_in]   SMEM (scalar reads)
    x_ref:   [n_in, tm]      VMEM (batch on lanes)
    out_ref: [n_out, tm]     VMEM (batch on lanes)
    """
    # Each feature is a lane-dense [1, tm] row; unrolled VPU FMA chain over K.
    rows = [x_ref[k:k + 1, :] for k in range(n_in)]
    for o in range(n_out):
        acc = w_ref[o, 0] * rows[0]
        for k in range(1, n_in):
            acc = acc + w_ref[o, k] * rows[k]
        out_ref[o:o + 1, :] = max_angle * jnp.tanh(acc)   # tanh -> EUP slot


@partial(jax.jit, static_argnames=("max_angle", "tm"))
def pid_controller_forward(x, w, *, max_angle: float = MAX_ANGLE, tm: int = _DEFAULT_TM):
    """Forward pass: max_angle * tanh(x @ w.T).

    x: [batch, n_inputs]
    w: [n_output, n_inputs]   (PyTorch nn.Linear weight layout, no bias)
    returns [batch, n_output] float32
    """
    x = x.astype(jnp.float32)
    w = w.astype(jnp.float32)
    batch, n_in = x.shape
    n_out, n_in_w = w.shape
    assert n_in == n_in_w, "weight / input feature mismatch"

    # Put the batch on the lane axis: one cheap transpose makes the HBM->VMEM
    # DMA contiguous (n_in rows of batch*4 bytes) instead of 12-byte strided rows.
    x_t = x.T  # [n_in, batch]

    # Lane tile along batch: multiple of 128, large enough to amortize the
    # ~0.35us per-grid-step overhead, small enough that the "parallel" grid has
    # >= 2 steps so both v7x TensorCores get work.
    if batch <= _LANE:
        tm_eff = batch                                   # single full block
    else:
        tm_eff = max(_LANE, min(tm, _round_up(_cdiv(batch, 2), _LANE)))
    grid = (_cdiv(batch, tm_eff),)

    kernel = partial(_pid_kernel, n_in=n_in, n_out=n_out, max_angle=float(max_angle))

    cost = pl.CostEstimate(
        flops=2 * batch * n_in * n_out + batch * n_out,
        transcendentals=batch * n_out,
        bytes_accessed=4 * (batch * n_in + n_in * n_out + batch * n_out),
    )

    out_t = pl.pallas_call(
        kernel,
        out_shape=jax.ShapeDtypeStruct((n_out, batch), jnp.float32),
        grid=grid,
        in_specs=[
            # Whole weight matrix as SMEM scalars (tiny: n_out x n_in).
            pl.BlockSpec(memory_space=pltpu.MemorySpace.SMEM),
            # Lane-dense input tiles: [n_in, tm_eff] sliding along the batch.
            pl.BlockSpec((n_in, tm_eff), lambda i: (0, i),
                         memory_space=pltpu.MemorySpace.VMEM),
        ],
        # Lane-dense output tiles, no HBM-side padding: [n_out, tm_eff].
        out_specs=pl.BlockSpec((n_out, tm_eff), lambda i: (0, i),
                               memory_space=pltpu.MemorySpace.VMEM),
        compiler_params=pltpu.CompilerParams(dimension_semantics=("parallel",)),
        cost_estimate=cost,
    )(w, x_t)

    # Back to the module's [batch, n_output] orientation (cheap for small n_out).
    return out_t.T


def reference_forward(x, w, max_angle: float = MAX_ANGLE):
    return max_angle * jnp.tanh(x.astype(jnp.float32) @ w.T.astype(jnp.float32))


if __name__ == "__main__":
    # PidController(n_inputs=3, n_output=1): inputs are (error, d_error, integral_error).
    n_inputs, n_output = 3, 1

    key = jax.random.PRNGKey(0)
    kx1, kx2, kx3, kw = jax.random.split(key, 4)

    # --- Case 1: module's actual init (weights filled with -0.0), tiny batch ---
    w_zero = jnp.full((n_output, n_inputs), -0.0, jnp.float32)
    x_small = jax.random.normal(kx1, (2, n_inputs), jnp.float32)
    out_small = jax.block_until_ready(pid_controller_forward(x_small, w_zero))
    ref_small = reference_forward(x_small, w_zero)
    assert out_small.shape == (2, n_output)
    assert jnp.allclose(out_small, ref_small, atol=1e-6, rtol=1e-6), \
        "mismatch vs reference (zero-init)"

    # --- Case 2: non-trivial weights, batch not a tile multiple (partial block) ---
    bound = 1.0 / float(jnp.sqrt(jnp.float32(n_inputs)))
    w = jax.random.uniform(kw, (n_output, n_inputs), jnp.float32, -bound, bound)
    x_odd = jax.random.normal(kx2, (300, n_inputs), jnp.float32)
    out_odd = jax.block_until_ready(pid_controller_forward(x_odd, w))
    ref_odd = reference_forward(x_odd, w)
    assert out_odd.shape == (300, n_output)
    assert jnp.allclose(out_odd, ref_odd, atol=1e-5, rtol=1e-5), \
        "mismatch vs reference (partial tile)"

    # --- Case 3: batch an exact multiple of the lane tile ---
    x_big = jax.random.normal(kx3, (512, n_inputs), jnp.float32)
    out_big = jax.block_until_ready(pid_controller_forward(x_big, w))
    ref_big = reference_forward(x_big, w)
    assert out_big.shape == (512, n_output)
    assert jnp.allclose(out_big, ref_big, atol=1e-5, rtol=1e-5), \
        "mismatch vs reference (full tiles)"

    print("KERNEL_OK")
</pallas_src>

<mosaic_0001>
module attributes {stable_mosaic.version = 11 : i64} {
  func.func @_pid_kernel(%arg0: i32, %arg1: memref<1x3xf32, #tpu.memory_space<smem>>, %arg2: memref<3x2xf32, #tpu.memory_space<vmem>>, %arg3: memref<1x2xf32, #tpu.memory_space<vmem>>) attributes {dimension_semantics = [#tpu.dimension_semantics<parallel>], iteration_bounds = array<i64: 1>, scalar_prefetch = 0 : i64, scratch_operands = 0 : i64, tpu.core_type = #tpu.core_type<tc>, window_params = [{transform_indices = @transform_0, window_bounds = array<i64: 1, 3>}, {transform_indices = @transform_1, window_bounds = array<i64: 3, 2>}, {transform_indices = @transform_2, window_bounds = array<i64: 1, 2>}]} {
    %c0 = arith.constant 0 : index
    %c0_0 = arith.constant 0 : index
    %0 = vector.load %arg2[%c0, %c0_0] : memref<3x2xf32, #tpu.memory_space<vmem>>, vector<1x2xf32>
    %c1 = arith.constant 1 : index
    %c0_1 = arith.constant 0 : index
    %1 = vector.load %arg2[%c1, %c0_1] : memref<3x2xf32, #tpu.memory_space<vmem>>, vector<1x2xf32>
    %c2 = arith.constant 2 : index
    %c0_2 = arith.constant 0 : index
    %2 = vector.load %arg2[%c2, %c0_2] : memref<3x2xf32, #tpu.memory_space<vmem>>, vector<1x2xf32>
    %c0_3 = arith.constant 0 : index
    %c0_4 = arith.constant 0 : index
    %3 = memref.load %arg1[%c0_3, %c0_4] : memref<1x3xf32, #tpu.memory_space<smem>>
    %4 = vector.broadcast %3 : f32 to vector<1x2xf32>
    %5 = arith.mulf %4, %0 : vector<1x2xf32>
    %c0_5 = arith.constant 0 : index
    %c1_6 = arith.constant 1 : index
    %6 = memref.load %arg1[%c0_5, %c1_6] : memref<1x3xf32, #tpu.memory_space<smem>>
    %7 = vector.broadcast %6 : f32 to vector<1x2xf32>
    %8 = arith.mulf %7, %1 : vector<1x2xf32>
    %9 = arith.addf %5, %8 : vector<1x2xf32>
    %c0_7 = arith.constant 0 : index
    %c2_8 = arith.constant 2 : index
    %10 = memref.load %arg1[%c0_7, %c2_8] : memref<1x3xf32, #tpu.memory_space<smem>>
    %11 = vector.broadcast %10 : f32 to vector<1x2xf32>
    %12 = arith.mulf %11, %2 : vector<1x2xf32>
    %13 = arith.addf %9, %12 : vector<1x2xf32>
    %14 = math.tanh %13 : vector<1x2xf32>
    %cst = arith.constant 0.261799395 : f32
    %15 = vector.broadcast %cst : f32 to vector<1x2xf32>
    %16 = arith.mulf %15, %14 : vector<1x2xf32>
    %c0_9 = arith.constant 0 : index
    %c0_10 = arith.constant 0 : index
    %17 = vector.load %arg3[%c0_9, %c0_10] : memref<1x2xf32, #tpu.memory_space<vmem>>, vector<1x2xf32>
    tpu.vector_store %arg3[%c0_9, %c0_10], %16 {strides = array<i32>} : memref<1x2xf32, #tpu.memory_space<vmem>>, vector<1x2xf32>,
    return
  }
  func.func @transform_0(%arg0: i32) -> (i32, i32) {
    %c0_i32 = arith.constant 0 : i32
    %c0_i32_0 = arith.constant 0 : i32
    %c0_i32_1 = arith.constant 0 : i32
    return %c0_i32, %c0_i32_0 : i32, i32
  }
  func.func @transform_1(%arg0: i32) -> (i32, i32) {
    %c0_i32 = arith.constant 0 : i32
    %c0_i32_0 = arith.constant 0 : i32
    return %c0_i32, %arg0 : i32, i32
  }
  func.func @transform_2(%arg0: i32) -> (i32, i32) {
    %c0_i32 = arith.constant 0 : i32
    %c0_i32_0 = arith.constant 0 : i32
    return %c0_i32, %arg0 : i32, i32
  }
}

</mosaic_0001>

<llo_original>
// kernel: pid_controller_forward.1
$region0: #{pid_controller_forward.1}
  #allocation0 [shape = 'u32[]', space=smem, size = 0x4, offset = 0x4, fixed_abs, tag = 'smem constant byte address 0x4 - core index']
  #allocation1 [shape = 'u32[144,128]{1,0:T(1,128)}', space=vmem, size = 0x12000, scoped, tag = 'internal scratch']
  %s0 = inlined_call_operand.vmem [shape: f32[1,3], index: 0, kind: input, shape index: {}]
  %s1 = inlined_call_operand.vmem [shape: f32[3,2], index: 1, kind: input, shape index: {}]
  %s2 = inlined_call_operand.hbm [shape: f32[1,2], index: 2, kind: output, shape index: {}]
  %s3 = sld [smem:[#allocation0]]
  $region22: #{pid_controller_forward.1} parent=0
    _
  %s5 = ssub.s32 1, %s3
  %s6 = scalar_select 0, %s5, %s3
  $region1: #{pid_controller_forward.1} parent=0
    #allocation2 [shape = 'u8[512]{0}', space=smem, size = 0x200, scoped, tag = 'input window, operand 0, single buffered']
    #allocation3 [shape = 's32[1]{0}', space=sflag, size = 0x4, scoped, tag = 'scoped memory for pid_controller_forward.1']
    #allocation4 [shape = 's32[1]{0}', space=sflag, size = 0x4, scoped, tag = 'scoped memory for pid_controller_forward.1']
    #allocation5 [shape = 'u8[512]{0}', space=vmem, size = 0x400, scoped, tag = 'output window, operand 0, single buffered']
    %7 = vsyncpa [#allocation4], 0
    %8 = vsyncpa [#allocation3], 0
    // Predicated region
    $region2: #{pid_controller_forward.1} parent=1 // pred_check
      _
    $region3: #{pid_controller_forward.1} parent=1 // pred_check_branch
      %10 = sbr.rel (0) target = $region5
    $region4: #{pid_controller_forward.1} parent=1 // pred_region
      %s12 = ssub.s32 16, 16
      %13 = vsyncadd [#allocation4], %s12
      %s15 = sshll.u32 %s0, 4
      %s16 = int_to_ptr.vmem [resolvable:$true] %s15
      %18 = dma.vmem_to_smem %s16, 16, [#allocation2], [#allocation4]
    $region5: #{pid_controller_forward.1} parent=1 // pred_fallthru
      _
    // Predicated region
    $region6: #{pid_controller_forward.1} parent=1 // pred_check
      _
    $region7: #{pid_controller_forward.1} parent=1 // pred_check_branch
      %20 = sbr.rel (0) target = $region9
    $region8: #{pid_controller_forward.1} parent=1 // pred_region
      _
    $region9: #{pid_controller_forward.1} parent=1 // pred_fallthru
      _
    // Predicated region
    $region10: #{pid_controller_forward.1} parent=1 // pred_check
      _
    $region11: #{pid_controller_forward.1} parent=1 // pred_check_branch
      %22 = sbr.rel (0) target = $region13
    $region12: #{pid_controller_forward.1} parent=1 // pred_region
      %23 = dma.done [#allocation4], 16
    $region13: #{pid_controller_forward.1} parent=1 // pred_fallthru
      _
    %24 = sfence
    %v25 = vld [vmem:[%s1] sm:$0x1]
    %v26 = vld [vmem:[%s1 + $0x1] sm:$0x1]
    %v27 = vld [vmem:[%s1 + $0x2] sm:$0x1]
    %s28 = sld [smem:[#allocation2]]
    %v29 = vstv %s28
    %v30 = vmul.f32 %v29, %v25
    %s31 = sld [smem:[#allocation2 + $0x1]]
    %v32 = vstv %s31
    %v33 = vmul.f32 %v32, %v26
    %v34 = vadd.f32 %v30, %v33
    %s35 = sld [smem:[#allocation2 + $0x2]]
    %v36 = vstv %s35
    %v37 = vmul.f32 %v36, %v27
    %v38 = vadd.f32 %v34, %v37
    %v39 = vtanh.pop %v38
    %v40 = vmul.f32 %v39, 0.2617994
    %vm41 = vcmask 8192
    %42 = vst.msk [vmem:[#allocation5] sm:$0x1] %vm41, %v40
    // Predicated region
    $region14: #{pid_controller_forward.1} parent=1 // pred_check
      _
    $region15: #{pid_controller_forward.1} parent=1 // pred_check_branch
      %44 = sbr.rel (0) target = $region17
    $region16: #{pid_controller_forward.1} parent=1 // pred_region
      %s46 = ssub.s32 16, 16
      %47 = vsyncadd [#allocation3], %s46
      %s49 = sshll.u32 [#allocation5], 4
      %s50 = int_to_ptr.vmem [resolvable:$true] %s49
      %52 = dma.vmem_to_hbm [thread:$0]  %s50, 16, %s2, [#allocation3]
    $region17: #{pid_controller_forward.1} parent=1 // pred_fallthru
      _
    // Predicated region
    $region18: #{pid_controller_forward.1} parent=1 // pred_check
      _
    $region19: #{pid_controller_forward.1} parent=1 // pred_check_branch
      %54 = sbr.rel (0) target = $region21
    $region20: #{pid_controller_forward.1} parent=1 // pred_region
      %55 = dma.done [#allocation3], 16
    $region21: #{pid_controller_forward.1} parent=1 // pred_fallthru
      _
    %56 = vsyncpa [#allocation3], 1
    %57 = vsyncpa [#allocation4], 1

</llo_original>
